<compile_context>
chip_gen: v5e
topology: v5e:2x2
jax: 0.10.0
libtpu: 0.0.40
codegen_flags: <defaults>
</compile_context>

<pallas_src>
import jax
import jax.numpy as jnp
from jax.experimental import pallas as pl
from jax.experimental.pallas import tpu as pltpu


def _round_up(n, m):
    return ((n + m - 1) // m) * m


def _pnn_mlp_kernel(x_ref, w1_ref, b1_ref, w2_ref, b2_ref, w3_ref, b3_ref, o_ref):
    """Fused 3-layer MLP on one batch tile: relu(relu(x@W1+b1)@W2+b2)@W3+b3."""
    x = x_ref[...].astype(w1_ref.dtype)                                  # (TB, D)
    h1 = jnp.dot(x, w1_ref[...], preferred_element_type=jnp.float32)    # (TB, HP)
    h1 = jnp.maximum(h1 + b1_ref[...], 0.0)                             # f32 bias+ReLU
    h2 = jnp.dot(h1.astype(w2_ref.dtype), w2_ref[...],
                 preferred_element_type=jnp.float32)                    # (TB, HP)
    h2 = jnp.maximum(h2 + b2_ref[...], 0.0)
    out = jnp.dot(h2.astype(w3_ref.dtype), w3_ref[...],
                  preferred_element_type=jnp.float32)                   # (TB, OP)
    o_ref[...] = (out + b3_ref[...]).astype(o_ref.dtype)


def init_params(key, input_size, hidden_size, output_size):
    """Synthetic parameters with shapes matching MNISTMLP_PNN column 0.

    Weights are stored as (in_features, out_features) so the matmul is x @ W + b
    (transpose of torch's nn.Linear storage).
    """
    k1, k2, k3 = jax.random.split(key, 3)
    s1 = 1.0 / jnp.sqrt(float(input_size))
    s2 = 1.0 / jnp.sqrt(float(hidden_size))
    w1 = jax.random.uniform(k1, (input_size, hidden_size), jnp.float32, -s1, s1)
    b1 = jnp.zeros((1, hidden_size), jnp.float32)
    w2 = jax.random.uniform(k2, (hidden_size, hidden_size), jnp.float32, -s2, s2)
    b2 = jnp.zeros((1, hidden_size), jnp.float32)
    w3 = jax.random.uniform(k3, (hidden_size, output_size), jnp.float32, -s2, s2)
    b3 = jnp.zeros((1, output_size), jnp.float32)
    return (w1, b1, w2, b2, w3, b3)


def pad_params(params, param_dtype=jnp.float32):
    """One-time lane padding of hidden/output widths to multiples of 128.

    Zero padding is exact: padded hidden units receive zero pre-activations
    (ReLU(0)=0) and padded output columns are sliced away by the wrapper.
    Weights may be cast to bf16 for the MXU; biases stay f32.
    """
    w1, b1, w2, b2, w3, b3 = params
    D, H = w1.shape
    O = w3.shape[1]
    HP = _round_up(H, 128)
    OP = _round_up(O, 128)

    def pad2(a, rows, cols):
        return jnp.pad(a, ((0, rows - a.shape[0]), (0, cols - a.shape[1])))

    padded = (
        pad2(w1, D, HP).astype(param_dtype),
        pad2(b1, 1, HP).astype(jnp.float32),
        pad2(w2, HP, HP).astype(param_dtype),
        pad2(b2, 1, HP).astype(jnp.float32),
        pad2(w3, HP, OP).astype(param_dtype),
        pad2(b3, 1, OP).astype(jnp.float32),
    )
    return padded, O


def pnn_forward(x_nchw, padded_params, out_features, *, block_b=128):
    """Forward pass of the first PNN column (task_idx == 0)."""
    w1, b1, w2, b2, w3, b3 = padded_params
    D, HP = w1.shape
    OP = w3.shape[1]

    B = x_nchw.shape[0]
    x = x_nchw.reshape(B, -1).astype(jnp.float32)   # torch x.view(B, -1)
    assert x.shape[1] == D, f"input features {x.shape[1]} != {D}"

    # Batch tiling: TB <= 128 keeps the f32 intermediates (TB x 128) well inside
    # the vreg file; weights stay VMEM-resident across all batch blocks.
    TB = min(block_b, B)
    BP = _round_up(B, TB)
    if BP != B:
        x = jnp.pad(x, ((0, BP - B), (0, 0)))
    grid = (BP // TB,)

    batch_spec = pl.BlockSpec((TB, D), lambda i: (i, 0))
    resident = lambda shape: pl.BlockSpec(shape, lambda i: (0, 0))

    out = pl.pallas_call(
        _pnn_mlp_kernel,
        out_shape=jax.ShapeDtypeStruct((BP, OP), jnp.float32),
        grid=grid,
        in_specs=[
            batch_spec,
            resident((D, HP)), resident((1, HP)),
            resident((HP, HP)), resident((1, HP)),
            resident((HP, OP)), resident((1, OP)),
        ],
        out_specs=pl.BlockSpec((TB, OP), lambda i: (i, 0)),
        compiler_params=pltpu.CompilerParams(
            dimension_semantics=("parallel",),
        ),
    )(x, w1, b1, w2, b2, w3, b3)

    return out[:B, :out_features]


def _reference(x_nchw, params):
    w1, b1, w2, b2, w3, b3 = params
    xf = x_nchw.reshape(x_nchw.shape[0], -1).astype(jnp.float32)
    h = jnp.maximum(xf @ w1 + b1, 0.0)
    h = jnp.maximum(h @ w2 + b2, 0.0)
    return h @ w3 + b3


if __name__ == "__main__":
    key = jax.random.PRNGKey(0)
    kx, kp, kx2 = jax.random.split(key, 3)

    # Small MNIST-like input: batch=2, 1 channel, 16x16 -> input_size=256.
    B, C, Hs, Ws = 2, 1, 16, 16
    input_size = C * Hs * Ws
    hidden_size = 100      # MNISTMLP hidden width
    output_size = 10

    x = jax.random.normal(kx, (B, C, Hs, Ws), jnp.float32)
    params = init_params(kp, input_size, hidden_size, output_size)

    # --- f32 path, tiny batch (single grid block) ---
    padded_f32, O = pad_params(params, jnp.float32)
    out = pnn_forward(x, padded_f32, O)
    out = jax.block_until_ready(out)
    ref = _reference(x, params)
    assert out.shape == (B, output_size)
    assert jnp.allclose(out, ref, atol=1e-4, rtol=1e-4)

    # --- f32 path, batch-tiled (exercises grid > 1 with resident weights) ---
    B2 = 256
    x2 = jax.random.normal(kx2, (B2, C, Hs, Ws), jnp.float32)
    out2 = jax.block_until_ready(pnn_forward(x2, padded_f32, O))
    ref2 = _reference(x2, params)
    assert out2.shape == (B2, output_size)
    assert jnp.allclose(out2, ref2, atol=1e-4, rtol=1e-4)

    # --- bf16-weight path (v6e/v7x MXU fast path); loose numerical check ---
    padded_bf16, _ = pad_params(params, jnp.bfloat16)
    out_bf16 = jax.block_until_ready(pnn_forward(x2, padded_bf16, O))
    assert out_bf16.shape == (B2, output_size)
    assert bool(jnp.all(jnp.isfinite(out_bf16)))
    assert jnp.allclose(out_bf16, ref2, atol=1e-1, rtol=1e-1)

    print("KERNEL_OK")
</pallas_src>

<mosaic_0001>
module attributes {stable_mosaic.version = 11 : i64} {
  func.func @_pnn_mlp_kernel(%arg0: i32, %arg1: memref<2x256xf32, #tpu.memory_space<vmem>>, %arg2: memref<256x128xf32, #tpu.memory_space<vmem>>, %arg3: memref<1x128xf32, #tpu.memory_space<vmem>>, %arg4: memref<128x128xf32, #tpu.memory_space<vmem>>, %arg5: memref<1x128xf32, #tpu.memory_space<vmem>>, %arg6: memref<128x128xf32, #tpu.memory_space<vmem>>, %arg7: memref<1x128xf32, #tpu.memory_space<vmem>>, %arg8: memref<2x128xf32, #tpu.memory_space<vmem>>) attributes {dimension_semantics = [#tpu.dimension_semantics<parallel>], iteration_bounds = array<i64: 1>, scalar_prefetch = 0 : i64, scratch_operands = 0 : i64, tpu.core_type = #tpu.core_type<tc>, window_params = [{transform_indices = @transform_0, window_bounds = array<i64: 2, 256>}, {pipeline_mode = #tpu.pipeline_mode<synchronous>, transform_indices = @transform_1, window_bounds = array<i64: 256, 128>}, {pipeline_mode = #tpu.pipeline_mode<synchronous>, transform_indices = @transform_2, window_bounds = array<i64: 1, 128>}, {pipeline_mode = #tpu.pipeline_mode<synchronous>, transform_indices = @transform_3, window_bounds = array<i64: 128, 128>}, {pipeline_mode = #tpu.pipeline_mode<synchronous>, transform_indices = @transform_4, window_bounds = array<i64: 1, 128>}, {pipeline_mode = #tpu.pipeline_mode<synchronous>, transform_indices = @transform_5, window_bounds = array<i64: 128, 128>}, {pipeline_mode = #tpu.pipeline_mode<synchronous>, transform_indices = @transform_6, window_bounds = array<i64: 1, 128>}, {transform_indices = @transform_7, window_bounds = array<i64: 2, 128>}]} {
    %c0 = arith.constant 0 : index
    %c0_0 = arith.constant 0 : index
    %0 = vector.load %arg1[%c0, %c0_0] : memref<2x256xf32, #tpu.memory_space<vmem>>, vector<2x256xf32>
    %c0_1 = arith.constant 0 : index
    %c0_2 = arith.constant 0 : index
    %1 = vector.load %arg2[%c0_1, %c0_2] : memref<256x128xf32, #tpu.memory_space<vmem>>, vector<256x128xf32>
    %cst = arith.constant dense<0.000000e+00> : vector<2x128xf32>
    %2 = tpu.matmul %0, %1, %cst {dimension_numbers = #tpu.dot_dimension_numbers<[1], [0], [0], [1], [0, 0, 1, 1], [], []>} : vector<2x256xf32>, vector<256x128xf32>, vector<2x128xf32> -> vector<2x128xf32>
    %c0_3 = arith.constant 0 : index
    %c0_4 = arith.constant 0 : index
    %3 = vector.load %arg3[%c0_3, %c0_4] : memref<1x128xf32, #tpu.memory_space<vmem>>, vector<1x128xf32>
    %4 = vector.broadcast %3 : vector<1x128xf32> to vector<2x128xf32>
    %5 = arith.addf %2, %4 : vector<2x128xf32>
    %cst_5 = arith.constant 0.000000e+00 : f32
    %6 = vector.broadcast %cst_5 : f32 to vector<2x128xf32>
    %7 = arith.maximumf %5, %6 : vector<2x128xf32>
    %c0_6 = arith.constant 0 : index
    %c0_7 = arith.constant 0 : index
    %8 = vector.load %arg4[%c0_6, %c0_7] : memref<128x128xf32, #tpu.memory_space<vmem>>, vector<128x128xf32>
    %cst_8 = arith.constant dense<0.000000e+00> : vector<2x128xf32>
    %9 = tpu.matmul %7, %8, %cst_8 {dimension_numbers = #tpu.dot_dimension_numbers<[1], [0], [0], [1], [0, 0, 1, 1], [], []>} : vector<2x128xf32>, vector<128x128xf32>, vector<2x128xf32> -> vector<2x128xf32>
    %c0_9 = arith.constant 0 : index
    %c0_10 = arith.constant 0 : index
    %10 = vector.load %arg5[%c0_9, %c0_10] : memref<1x128xf32, #tpu.memory_space<vmem>>, vector<1x128xf32>
    %11 = vector.broadcast %10 : vector<1x128xf32> to vector<2x128xf32>
    %12 = arith.addf %9, %11 : vector<2x128xf32>
    %cst_11 = arith.constant 0.000000e+00 : f32
    %13 = vector.broadcast %cst_11 : f32 to vector<2x128xf32>
    %14 = arith.maximumf %12, %13 : vector<2x128xf32>
    %c0_12 = arith.constant 0 : index
    %c0_13 = arith.constant 0 : index
    %15 = vector.load %arg6[%c0_12, %c0_13] : memref<128x128xf32, #tpu.memory_space<vmem>>, vector<128x128xf32>
    %cst_14 = arith.constant dense<0.000000e+00> : vector<2x128xf32>
    %16 = tpu.matmul %14, %15, %cst_14 {dimension_numbers = #tpu.dot_dimension_numbers<[1], [0], [0], [1], [0, 0, 1, 1], [], []>} : vector<2x128xf32>, vector<128x128xf32>, vector<2x128xf32> -> vector<2x128xf32>
    %c0_15 = arith.constant 0 : index
    %c0_16 = arith.constant 0 : index
    %17 = vector.load %arg7[%c0_15, %c0_16] : memref<1x128xf32, #tpu.memory_space<vmem>>, vector<1x128xf32>
    %18 = vector.broadcast %17 : vector<1x128xf32> to vector<2x128xf32>
    %19 = arith.addf %16, %18 : vector<2x128xf32>
    %c0_17 = arith.constant 0 : index
    %c0_18 = arith.constant 0 : index
    %20 = vector.load %arg8[%c0_17, %c0_18] : memref<2x128xf32, #tpu.memory_space<vmem>>, vector<2x128xf32>
    tpu.vector_store %arg8[%c0_17, %c0_18], %19 {strides = array<i32>} : memref<2x128xf32, #tpu.memory_space<vmem>>, vector<2x128xf32>,
    return
  }
  func.func @transform_0(%arg0: i32) -> (i32, i32) {
    %c0_i32 = arith.constant 0 : i32
    %c0_i32_0 = arith.constant 0 : i32
    return %arg0, %c0_i32 : i32, i32
  }
  func.func @transform_1(%arg0: i32) -> (i32, i32) {
    %c0_i32 = arith.constant 0 : i32
    %c0_i32_0 = arith.constant 0 : i32
    %c0_i32_1 = arith.constant 0 : i32
    return %c0_i32, %c0_i32_0 : i32, i32
  }
  func.func @transform_2(%arg0: i32) -> (i32, i32) {
    %c0_i32 = arith.constant 0 : i32
    %c0_i32_0 = arith.constant 0 : i32
    %c0_i32_1 = arith.constant 0 : i32
    return %c0_i32, %c0_i32_0 : i32, i32
  }
  func.func @transform_3(%arg0: i32) -> (i32, i32) {
    %c0_i32 = arith.constant 0 : i32
    %c0_i32_0 = arith.constant 0 : i32
    %c0_i32_1 = arith.constant 0 : i32
    return %c0_i32, %c0_i32_0 : i32, i32
  }
  func.func @transform_4(%arg0: i32) -> (i32, i32) {
    %c0_i32 = arith.constant 0 : i32
    %c0_i32_0 = arith.constant 0 : i32
    %c0_i32_1 = arith.constant 0 : i32
    return %c0_i32, %c0_i32_0 : i32, i32
  }
  func.func @transform_5(%arg0: i32) -> (i32, i32) {
    %c0_i32 = arith.constant 0 : i32
    %c0_i32_0 = arith.constant 0 : i32
    %c0_i32_1 = arith.constant 0 : i32
    return %c0_i32, %c0_i32_0 : i32, i32
  }
  func.func @transform_6(%arg0: i32) -> (i32, i32) {
    %c0_i32 = arith.constant 0 : i32
    %c0_i32_0 = arith.constant 0 : i32
    %c0_i32_1 = arith.constant 0 : i32
    return %c0_i32, %c0_i32_0 : i32, i32
  }
  func.func @transform_7(%arg0: i32) -> (i32, i32) {
    %c0_i32 = arith.constant 0 : i32
    %c0_i32_0 = arith.constant 0 : i32
    return %arg0, %c0_i32 : i32, i32
  }
}

</mosaic_0001>

<llo_original>
// kernel: tpu_custom_call.1
$region0: #{tpu_custom_call.1}
  #allocation0 [shape = 'u32[]', space=smem, size = 0x4, offset = 0x4, fixed_abs, tag = 'smem constant byte address 0x4 - core index']
  #allocation1 [shape = 'u32[72,128]{1,0:T(1,128)}', space=vmem, size = 0x9000, scoped, tag = 'internal scratch']
  %s0 = inlined_call_operand.hbm [shape: f32[2,256], index: 0, kind: input, shape index: {}]
  %s1 = inlined_call_operand.hbm [shape: f32[256,128], index: 1, kind: input, shape index: {}]
  %s2 = inlined_call_operand.vmem [shape: f32[1,128], index: 2, kind: input, shape index: {}]
  %s3 = inlined_call_operand.hbm [shape: f32[128,128], index: 3, kind: input, shape index: {}]
  %s4 = inlined_call_operand.vmem [shape: f32[1,128], index: 4, kind: input, shape index: {}]
  %s5 = inlined_call_operand.hbm [shape: f32[128,128], index: 5, kind: input, shape index: {}]
  %s6 = inlined_call_operand.vmem [shape: f32[1,128], index: 6, kind: input, shape index: {}]
  %s7 = inlined_call_operand.hbm [shape: f32[2,128], index: 7, kind: output, shape index: {}]
  %s8 = sld [smem:[#allocation0]]
  $region54: #{tpu_custom_call.1} parent=0
    _
  %s10 = ssub.s32 1, %s8
  %s11 = scalar_select 0, %s10, %s8
  $region1: #{tpu_custom_call.1} parent=0
    #allocation2 [shape = 'u8[2048]{0}', space=vmem, size = 0x800, scoped, tag = 'input window, operand 0, single buffered']
    #allocation3 [shape = 's32[1]{0}', space=sflag, size = 0x4, scoped, tag = 'scoped memory for tpu_custom_call.1']
    #allocation4 [shape = 's32[1]{0}', space=sflag, size = 0x4, scoped, tag = 'scoped memory for tpu_custom_call.1']
    #allocation5 [shape = 'u8[131072]{0}', space=vmem, size = 0x20000, scoped, tag = 'input window, operand 1, single buffered']
    #allocation6 [shape = 's32[1]{0}', space=sflag, size = 0x4, scoped, tag = 'scoped memory for tpu_custom_call.1']
    #allocation7 [shape = 'u8[65536]{0}', space=vmem, size = 0x10000, scoped, tag = 'input window, operand 3, single buffered']
    #allocation8 [shape = 'u8[65536]{0}', space=vmem, size = 0x10000, scoped, tag = 'input window, operand 5, single buffered']
    #allocation9 [shape = 's32[1]{0}', space=sflag, size = 0x4, scoped, tag = 'scoped memory for tpu_custom_call.1']
    #allocation10 [shape = 'u8[1024]{0}', space=vmem, size = 0x400, scoped, tag = 'output window, operand 0, single buffered']
    %12 = vsyncpa [#allocation3], 0
    %13 = vsyncpa [#allocation6], 0
    %14 = vsyncpa [#allocation9], 0
    %15 = vsyncpa [#allocation4], 0
    // Predicated region
    $region2: #{tpu_custom_call.1} parent=1 // pred_check
      _
    $region3: #{tpu_custom_call.1} parent=1 // pred_check_branch
      %17 = sbr.rel (0) target = $region5
    $region4: #{tpu_custom_call.1} parent=1 // pred_region
      %19 = vsyncadd [#allocation3], 0
      %s21 = sshll.u32 %s0, 4
      %s22 = int_to_ptr.hbm [resolvable:$true] %s21
      %s23 = sshll.u32 [#allocation2], 4
      %s24 = int_to_ptr.vmem [resolvable:$true] %s23
      %26 = dma.hbm_to_vmem [thread:$0]  %s22, 64, %s24, [#allocation3]
    $region5: #{tpu_custom_call.1} parent=1 // pred_fallthru
      _
    // Predicated region
    $region6: #{tpu_custom_call.1} parent=1 // pred_check
      _
    $region7: #{tpu_custom_call.1} parent=1 // pred_check_branch
      %28 = sbr.rel (0) target = $region9
    $region8: #{tpu_custom_call.1} parent=1 // pred_region
      %30 = vsyncadd [#allocation6], 0
      %s31 = sshll.u32 %s1, 4
      %s32 = int_to_ptr.hbm [resolvable:$true] %s31
      %s33 = sshll.u32 [#allocation5], 4
      %s34 = int_to_ptr.vmem [resolvable:$true] %s33
      %39 = dma.hbm_to_vmem [thread:$0]  %s32, 4096, %s34, [#allocation6], 128, 128, 8
    $region9: #{tpu_custom_call.1} parent=1 // pred_fallthru
      _
    // Predicated region
    $region10: #{tpu_custom_call.1} parent=1 // pred_check
      _
    $region11: #{tpu_custom_call.1} parent=1 // pred_check_branch
      %41 = sbr.rel (0) target = $region13
    $region12: #{tpu_custom_call.1} parent=1 // pred_region
      _
    $region13: #{tpu_custom_call.1} parent=1 // pred_fallthru
      _
    // Predicated region
    $region14: #{tpu_custom_call.1} parent=1 // pred_check
      _
    $region15: #{tpu_custom_call.1} parent=1 // pred_check_branch
      %43 = sbr.rel (0) target = $region17
    $region16: #{tpu_custom_call.1} parent=1 // pred_region
      %45 = vsyncadd [#allocation6], 0
      %s46 = sshll.u32 %s3, 4
      %s47 = int_to_ptr.hbm [resolvable:$true] %s46
      %s48 = sshll.u32 [#allocation7], 4
      %s49 = int_to_ptr.vmem [resolvable:$true] %s48
      %54 = dma.hbm_to_vmem [thread:$0]  %s47, 2048, %s49, [#allocation6], 128, 128, 8
    $region17: #{tpu_custom_call.1} parent=1 // pred_fallthru
      _
    // Predicated region
    $region18: #{tpu_custom_call.1} parent=1 // pred_check
      _
    $region19: #{tpu_custom_call.1} parent=1 // pred_check_branch
      %56 = sbr.rel (0) target = $region21
    $region20: #{tpu_custom_call.1} parent=1 // pred_region
      _
    $region21: #{tpu_custom_call.1} parent=1 // pred_fallthru
      _
    // Predicated region
    $region22: #{tpu_custom_call.1} parent=1 // pred_check
      _
    $region23: #{tpu_custom_call.1} parent=1 // pred_check_branch
      %58 = sbr.rel (0) target = $region25
    $region24: #{tpu_custom_call.1} parent=1 // pred_region
      %60 = vsyncadd [#allocation9], 0
      %s61 = sshll.u32 %s5, 4
      %s62 = int_to_ptr.hbm [resolvable:$true] %s61
      %s63 = sshll.u32 [#allocation8], 4
      %s64 = int_to_ptr.vmem [resolvable:$true] %s63
      %69 = dma.hbm_to_vmem [thread:$0]  %s62, 2048, %s64, [#allocation9], 128, 128, 8
    $region25: #{tpu_custom_call.1} parent=1 // pred_fallthru
      _
    // Predicated region
    $region26: #{tpu_custom_call.1} parent=1 // pred_check
      _
    $region27: #{tpu_custom_call.1} parent=1 // pred_check_branch
      %71 = sbr.rel (0) target = $region29
    $region28: #{tpu_custom_call.1} parent=1 // pred_region
      _
    $region29: #{tpu_custom_call.1} parent=1 // pred_fallthru
      _
    // Predicated region
    $region30: #{tpu_custom_call.1} parent=1 // pred_check
      _
    $region31: #{tpu_custom_call.1} parent=1 // pred_check_branch
      %73 = sbr.rel (0) target = $region33
    $region32: #{tpu_custom_call.1} parent=1 // pred_region
      %75 = dma.done [#allocation3], 64
    $region33: #{tpu_custom_call.1} parent=1 // pred_fallthru
      _
    // Predicated region
    $region34: #{tpu_custom_call.1} parent=1 // pred_check
      _
    $region35: #{tpu_custom_call.1} parent=1 // pred_check_branch
      %77 = sbr.rel (0) target = $region37
    $region36: #{tpu_custom_call.1} parent=1 // pred_region
      %79 = dma.done [#allocation6], 4096
    $region37: #{tpu_custom_call.1} parent=1 // pred_fallthru
      _
    // Predicated region
    $region38: #{tpu_custom_call.1} parent=1 // pred_check
      _
    $region39: #{tpu_custom_call.1} parent=1 // pred_check_branch
      %81 = sbr.rel (0) target = $region41
    $region40: #{tpu_custom_call.1} parent=1 // pred_region
      %83 = dma.done [#allocation6], 2048
    $region41: #{tpu_custom_call.1} parent=1 // pred_fallthru
      _
    // Predicated region
    $region42: #{tpu_custom_call.1} parent=1 // pred_check
      _
    $region43: #{tpu_custom_call.1} parent=1 // pred_check_branch
      %85 = sbr.rel (0) target = $region45
    $region44: #{tpu_custom_call.1} parent=1 // pred_region
      %87 = dma.done [#allocation9], 2048
    $region45: #{tpu_custom_call.1} parent=1 // pred_fallthru
      _
    %v88 = vld [vmem:[#allocation2] sm:$0xf]
    %v89 = vld [vmem:[#allocation5] sm:$0xff]
    %v90 = vld [vmem:[#allocation5 + $0x8] sm:$0xff]
    %v91 = vld [vmem:[#allocation5 + $0x10] sm:$0xff]
    %v92 = vld [vmem:[#allocation5 + $0x18] sm:$0xff]
    %v93 = vld [vmem:[#allocation5 + $0x20] sm:$0xff]
    %v94 = vld [vmem:[#allocation5 + $0x28] sm:$0xff]
    %v95 = vld [vmem:[#allocation5 + $0x30] sm:$0xff]
    %v96 = vld [vmem:[#allocation5 + $0x38] sm:$0xff]
    %v97 = vld [vmem:[#allocation5 + $0x40] sm:$0xff]
    %v98 = vld [vmem:[#allocation5 + $0x48] sm:$0xff]
    %v99 = vld [vmem:[#allocation5 + $0x50] sm:$0xff]
    %v100 = vld [vmem:[#allocation5 + $0x58] sm:$0xff]
    %v101 = vld [vmem:[#allocation5 + $0x60] sm:$0xff]
    %v102 = vld [vmem:[#allocation5 + $0x68] sm:$0xff]
    %v103 = vld [vmem:[#allocation5 + $0x70] sm:$0xff]
    %v104 = vld [vmem:[#allocation5 + $0x78] sm:$0xff]
    %v105 = vld [vmem:[#allocation5 + $0x80] sm:$0xff]
    %v106 = vld [vmem:[#allocation5 + $0x88] sm:$0xff]
    %v107 = vld [vmem:[#allocation5 + $0x90] sm:$0xff]
    %v108 = vld [vmem:[#allocation5 + $0x98] sm:$0xff]
    %v109 = vld [vmem:[#allocation5 + $0xa0] sm:$0xff]
    %v110 = vld [vmem:[#allocation5 + $0xa8] sm:$0xff]
    %v111 = vld [vmem:[#allocation5 + $0xb0] sm:$0xff]
    %v112 = vld [vmem:[#allocation5 + $0xb8] sm:$0xff]
    %v113 = vld [vmem:[#allocation5 + $0xc0] sm:$0xff]
    %v114 = vld [vmem:[#allocation5 + $0xc8] sm:$0xff]
    %v115 = vld [vmem:[#allocation5 + $0xd0] sm:$0xff]
    %v116 = vld [vmem:[#allocation5 + $0xd8] sm:$0xff]
    %v117 = vld [vmem:[#allocation5 + $0xe0] sm:$0xff]
    %v118 = vld [vmem:[#allocation5 + $0xe8] sm:$0xff]
    %v119 = vld [vmem:[#allocation5 + $0xf0] sm:$0xff]
    %v120 = vld [vmem:[#allocation5 + $0xf8] sm:$0xff]
    %v121 = vld [vmem:[%s2] sm:$0x1]
    %v123 = vperm.slane %v121, 0
    %126 = vst [vmem:[#allocation1] ss:$4 sm:$0xff] %v88
    %v127 = vld.sshfl [vmem:[#allocation1] sm:$0xff pattern:$0x73625140]
    %v128 = vld.sshfl [vmem:[#allocation1 + $0x8] sm:$0xff pattern:$0x73625140]
    %131 = vmatpush.msra.mxu0 %v104
    %132 = vmatpush.msra.mxu0 %v103
    %133 = vmatpush.msra.mxu0 %v102
    %134 = vmatpush.msra.mxu0 %v101
    %135 = vmatpush.msra.mxu0 %v100
    %136 = vmatpush.msra.mxu0 %v99
    %137 = vmatpush.msra.mxu0 %v98
    %138 = vmatpush.msra.mxu0 %v97
    %139 = vmatpush.msra.mxu0 %v96
    %140 = vmatpush.msra.mxu0 %v95
    %141 = vmatpush.msra.mxu0 %v94
    %142 = vmatpush.msra.mxu0 %v93
    %143 = vmatpush.msra.mxu0 %v92
    %144 = vmatpush.msra.mxu0 %v91
    %145 = vmatpush.msra.mxu0 %v90
    %146 = vmatpush.msra.mxu0 %v89
    %147 = vmatmul.f32.gmra.mxu0 %v127
    %v148 = vpop.f32.mrf.mxu0
    %v149 = vadd.f32 %v123, %v148
    %150 = vdwg.mxu0
    %151 = vmatpush.msra.mxu0 %v120
    %152 = vmatpush.msra.mxu0 %v119
    %153 = vmatpush.msra.mxu0 %v118
    %154 = vmatpush.msra.mxu0 %v117
    %155 = vmatpush.msra.mxu0 %v116
    %156 = vmatpush.msra.mxu0 %v115
    %157 = vmatpush.msra.mxu0 %v114
    %158 = vmatpush.msra.mxu0 %v113
    %159 = vmatpush.msra.mxu0 %v112
    %160 = vmatpush.msra.mxu0 %v111
    %161 = vmatpush.msra.mxu0 %v110
    %162 = vmatpush.msra.mxu0 %v109
    %163 = vmatpush.msra.mxu0 %v108
    %164 = vmatpush.msra.mxu0 %v107
    %165 = vmatpush.msra.mxu0 %v106
    %166 = vmatpush.msra.mxu0 %v105
    %167 = vmatmul.f32.gmra.mxu0 %v128
    %v168 = vpop.f32.mrf.mxu0
    %v169 = vadd.f32 %v149, %v168
    %170 = vdwg.mxu0
    %v171 = vmax.f32 %v169, 0.0
    %v172 = vld [vmem:[#allocation7] sm:$0xff]
    %v173 = vld [vmem:[#allocation7 + $0x8] sm:$0xff]
    %v174 = vld [vmem:[#allocation7 + $0x10] sm:$0xff]
    %v175 = vld [vmem:[#allocation7 + $0x18] sm:$0xff]
    %v176 = vld [vmem:[#allocation7 + $0x20] sm:$0xff]
    %v177 = vld [vmem:[#allocation7 + $0x28] sm:$0xff]
    %v178 = vld [vmem:[#allocation7 + $0x30] sm:$0xff]
    %v179 = vld [vmem:[#allocation7 + $0x38] sm:$0xff]
    %v180 = vld [vmem:[#allocation7 + $0x40] sm:$0xff]
    %v181 = vld [vmem:[#allocation7 + $0x48] sm:$0xff]
    %v182 = vld [vmem:[#allocation7 + $0x50] sm:$0xff]
    %v183 = vld [vmem:[#allocation7 + $0x58] sm:$0xff]
    %v184 = vld [vmem:[#allocation7 + $0x60] sm:$0xff]
    %v185 = vld [vmem:[#allocation7 + $0x68] sm:$0xff]
    %v186 = vld [vmem:[#allocation7 + $0x70] sm:$0xff]
    %v187 = vld [vmem:[#allocation7 + $0x78] sm:$0xff]
    %v188 = vld [vmem:[%s4] sm:$0x1]
    %v190 = vperm.slane %v188, 0
    %192 = vmatpush.msra.mxu0 %v187
    %193 = vmatpush.msra.mxu0 %v186
    %194 = vmatpush.msra.mxu0 %v185
    %195 = vmatpush.msra.mxu0 %v184
    %196 = vmatpush.msra.mxu0 %v183
    %197 = vmatpush.msra.mxu0 %v182
    %198 = vmatpush.msra.mxu0 %v181
    %199 = vmatpush.msra.mxu0 %v180
    %200 = vmatpush.msra.mxu0 %v179
    %201 = vmatpush.msra.mxu0 %v178
    %202 = vmatpush.msra.mxu0 %v177
    %203 = vmatpush.msra.mxu0 %v176
    %204 = vmatpush.msra.mxu0 %v175
    %205 = vmatpush.msra.mxu0 %v174
    %206 = vmatpush.msra.mxu0 %v173
    %207 = vmatpush.msra.mxu0 %v172
    %208 = vmatmul.f32.gmra.mxu0 %v171
    %v209 = vpop.f32.mrf.mxu0
    %v210 = vadd.f32 %v190, %v209
    %211 = vdwg.mxu0
    %v212 = vmax.f32 %v210, 0.0
    %v213 = vld [vmem:[#allocation8] sm:$0xff]
    %v214 = vld [vmem:[#allocation8 + $0x8] sm:$0xff]
    %v215 = vld [vmem:[#allocation8 + $0x10] sm:$0xff]
    %v216 = vld [vmem:[#allocation8 + $0x18] sm:$0xff]
    %v217 = vld [vmem:[#allocation8 + $0x20] sm:$0xff]
    %v218 = vld [vmem:[#allocation8 + $0x28] sm:$0xff]
    %v219 = vld [vmem:[#allocation8 + $0x30] sm:$0xff]
    %v220 = vld [vmem:[#allocation8 + $0x38] sm:$0xff]
    %v221 = vld [vmem:[#allocation8 + $0x40] sm:$0xff]
    %v222 = vld [vmem:[#allocation8 + $0x48] sm:$0xff]
    %v223 = vld [vmem:[#allocation8 + $0x50] sm:$0xff]
    %v224 = vld [vmem:[#allocation8 + $0x58] sm:$0xff]
    %v225 = vld [vmem:[#allocation8 + $0x60] sm:$0xff]
    %v226 = vld [vmem:[#allocation8 + $0x68] sm:$0xff]
    %v227 = vld [vmem:[#allocation8 + $0x70] sm:$0xff]
    %v228 = vld [vmem:[#allocation8 + $0x78] sm:$0xff]
    %v229 = vld [vmem:[%s6] sm:$0x1]
    %v231 = vperm.slane %v229, 0
    %233 = vmatpush.msra.mxu0 %v228
    %234 = vmatpush.msra.mxu0 %v227
    %235 = vmatpush.msra.mxu0 %v226
    %236 = vmatpush.msra.mxu0 %v225
    %237 = vmatpush.msra.mxu0 %v224
    %238 = vmatpush.msra.mxu0 %v223
    %239 = vmatpush.msra.mxu0 %v222
    %240 = vmatpush.msra.mxu0 %v221
    %241 = vmatpush.msra.mxu0 %v220
    %242 = vmatpush.msra.mxu0 %v219
    %243 = vmatpush.msra.mxu0 %v218
    %244 = vmatpush.msra.mxu0 %v217
    %245 = vmatpush.msra.mxu0 %v216
    %246 = vmatpush.msra.mxu0 %v215
    %247 = vmatpush.msra.mxu0 %v214
    %248 = vmatpush.msra.mxu0 %v213
    %249 = vmatmul.f32.gmra.mxu0 %v212
    %v250 = vpop.f32.mrf.mxu0
    %v251 = vadd.f32 %v231, %v250
    %252 = vdwg.mxu0
    %253 = vst [vmem:[#allocation10] sm:$0x3] %v251
    // Predicated region
    $region46: #{tpu_custom_call.1} parent=1 // pred_check
      _
    $region47: #{tpu_custom_call.1} parent=1 // pred_check_branch
      %255 = sbr.rel (0) target = $region49
    $region48: #{tpu_custom_call.1} parent=1 // pred_region
      %257 = vsyncadd [#allocation4], 0
      %s259 = sshll.u32 [#allocation10], 4
      %s260 = int_to_ptr.vmem [resolvable:$true] %s259
      %s261 = sshll.u32 %s7, 4
      %s262 = int_to_ptr.hbm [resolvable:$true] %s261
      %264 = dma.vmem_to_hbm [thread:$0]  %s260, 32, %s262, [#allocation4]
    $region49: #{tpu_custom_call.1} parent=1 // pred_fallthru
      _
    // Predicated region
    $region50: #{tpu_custom_call.1} parent=1 // pred_check
      _
    $region51: #{tpu_custom_call.1} parent=1 // pred_check_branch
      %266 = sbr.rel (0) target = $region53
    $region52: #{tpu_custom_call.1} parent=1 // pred_region
      %268 = dma.done [#allocation4], 32
    $region53: #{tpu_custom_call.1} parent=1 // pred_fallthru
      _
    %269 = vsyncpa [#allocation3], 1
    %270 = vsyncpa [#allocation6], 1
    %271 = vsyncpa [#allocation9], 1
    %272 = vsyncpa [#allocation4], 1

</llo_original>
